<compile_context>
chip_gen: v7x
topology: tpu7x:2x2x1
jax: 0.10.0
libtpu: 0.0.40
codegen_flags: <defaults>
</compile_context>

<pallas_src>
import functools

import jax
import jax.numpy as jnp
from jax.experimental import pallas as pl
from jax.experimental.pallas import tpu as pltpu


def _round_up(x, m):
    return (x + m - 1) // m * m


# ----------------------------------------------------------------------------
# Fused kernel: image MLP (Linear+ReLU -> Linear -> Tanh) + text counts-matmul.
# Grid axis 0 tiles the D (reduction) dimension of the first matmul.
# ----------------------------------------------------------------------------
def fused_encoder_kernel(x_ref,        # [B_pad, d_tile] bf16
                         w1_ref,       # [d_tile, F]     bf16
                         b1_ref,       # [1, F]          f32
                         w2_ref,       # [F, OUT]        bf16
                         b2_ref,       # [1, OUT]        f32
                         counts_ref,   # [B_pad, V]      f32 (token counts)
                         emb_ref,      # [V, E_pad]      f32 embedding table
                         img_ref,      # [B_pad, OUT]    f32 out
                         txt_ref,      # [B_pad, E_pad]  f32 out
                         acc_ref,      # [B_pad, F]      f32 VMEM scratch
                         *, inv_l):
    k = pl.program_id(0)

    @pl.when(k == 0)
    def _():
        acc_ref[...] = jnp.zeros_like(acc_ref)

    # Partial product of the first (extractor stand-in) matmul: bf16 MXU pass,
    # f32 accumulation across D tiles.
    acc_ref[...] += jnp.dot(x_ref[...], w1_ref[...],
                            preferred_element_type=jnp.float32)

    @pl.when(k == pl.num_programs(0) - 1)
    def _():
        # ---- image branch finalize: bias + ReLU, then Linear + Tanh fflayer.
        h = jnp.maximum(acc_ref[...] + b1_ref[...], 0.0)             # [B_pad, F]
        y = jnp.dot(h.astype(w2_ref.dtype), w2_ref[...],
                    preferred_element_type=jnp.float32)              # [B_pad, OUT]
        img_ref[...] = jnp.tanh(y + b2_ref[...])

        # ---- text branch: mean of embeddings == (counts @ emb) / L.
        # One small MXU pass (V is tiny) + one full-tile lane-dense store.
        txt = jnp.dot(counts_ref[...], emb_ref[...],
                      preferred_element_type=jnp.float32)            # [B_pad, E_pad]
        txt_ref[...] = txt * inv_l


def _fused_call(x, w1, b1, w2, b2, counts, emb, *, inv_l):
    b_pad, d = x.shape
    f = w1.shape[1]
    out = w2.shape[1]
    v, e_pad = emb.shape

    # D tiling: single step at toy sizes (no extra grid-step overhead); stream
    # lane-dense 512-wide w1 tiles when D is large (real VGG extractor sizes).
    if d > 4096 and d % 512 == 0:
        d_tile = 512
    else:
        d_tile = d
    nk = d // d_tile

    kernel = functools.partial(fused_encoder_kernel, inv_l=inv_l)

    grid_spec = pltpu.PrefetchScalarGridSpec(
        num_scalar_prefetch=0,
        grid=(nk,),
        in_specs=[
            pl.BlockSpec((b_pad, d_tile), lambda k: (0, k)),
            pl.BlockSpec((d_tile, f), lambda k: (k, 0)),
            pl.BlockSpec((1, f), lambda k: (0, 0)),
            pl.BlockSpec((f, out), lambda k: (0, 0)),
            pl.BlockSpec((1, out), lambda k: (0, 0)),
            pl.BlockSpec((b_pad, v), lambda k: (0, 0)),
            pl.BlockSpec((v, e_pad), lambda k: (0, 0)),
        ],
        out_specs=(
            pl.BlockSpec((b_pad, out), lambda k: (0, 0)),
            pl.BlockSpec((b_pad, e_pad), lambda k: (0, 0)),
        ),
        scratch_shapes=[pltpu.VMEM((b_pad, f), jnp.float32)],
    )

    return pl.pallas_call(
        kernel,
        out_shape=(
            jax.ShapeDtypeStruct((b_pad, out), jnp.float32),
            jax.ShapeDtypeStruct((b_pad, e_pad), jnp.float32),
        ),
        grid_spec=grid_spec,
        compiler_params=pltpu.CompilerParams(
            # D is a reduction axis -> "arbitrary".
            # TODO(synk): at real sizes add a leading "parallel" OUT/F axis for
            # v7x's two TensorCores and set vmem_limit_bytes per generation.
            dimension_semantics=("arbitrary",),
        ),
    )(x, w1, b1, w2, b2, counts, emb)


# ----------------------------------------------------------------------------
# One-time parameter preparation + jitted forward wrapper.
# ----------------------------------------------------------------------------
def prepare_params(params, lane=128):
    """Cast weights to bf16 and lane-pad the embedding table once (not per call)."""
    v, e = params["emb"].shape
    e_pad = _round_up(e, lane)
    emb_pad = jnp.pad(params["emb"].astype(jnp.float32),
                      ((0, 0), (0, e_pad - e)))
    return {
        "w1": params["w1"].astype(jnp.bfloat16),
        "b1": params["b1"].astype(jnp.float32),
        "w2": params["w2"].astype(jnp.bfloat16),
        "b2": params["b2"].astype(jnp.float32),
        "emb": emb_pad,
    }


def make_encoder(params):
    e = params["emb"].shape[1]
    v = params["emb"].shape[0]
    prep = prepare_params(params)

    @jax.jit
    def forward(image, text):
        b = image.shape[0]
        d = image.shape[1] * image.shape[2] * image.shape[3]
        seq_len = text.shape[1]
        b_pad = max(_round_up(b, 8), 8)          # fill sublanes / unmasked stores

        # NCHW flatten + bf16 cast done once here in the caller.
        x2d = image.reshape(b, d).astype(jnp.bfloat16)
        x2d = jnp.pad(x2d, ((0, b_pad - b), (0, 0)))

        # Exact token-count matrix: mean(emb[text], 1) == (counts @ emb) / L.
        # Out-of-range ids yield a zero one-hot row (no OOB table read).
        counts = jax.nn.one_hot(text, v, dtype=jnp.float32).sum(axis=1)
        counts = jnp.pad(counts, ((0, b_pad - b), (0, 0)))

        img_pad, txt_pad = _fused_call(x2d, prep["w1"], prep["b1"],
                                       prep["w2"], prep["b2"], counts,
                                       prep["emb"], inv_l=1.0 / seq_len)
        # Padded image rows are nonzero (tanh of biases) -> slice them off here.
        return img_pad[:b], txt_pad[:b, :e]

    return forward


# ----------------------------------------------------------------------------
# Demo / sanity check.
# ----------------------------------------------------------------------------
if __name__ == "__main__":
    B, C, H, W = 2, 4, 16, 16          # image: [B, C, H, W]  (NCHW)
    L = 8                              # text sequence length
    V = 32                             # vocabulary size (synthetic)
    E = 64                             # word-embedding dim
    D = C * H * W                      # 1024 flattened image dim
    FEAT = 128                         # stand-in for the VGG fc7 feature dim
    OUT = 1024                         # ImageEmbedding output_size=1024

    key = jax.random.PRNGKey(0)
    k_img, k_txt, k_w1, k_b1, k_w2, k_b2, k_emb = jax.random.split(key, 7)

    image = jax.random.normal(k_img, (B, C, H, W), dtype=jnp.float32)
    text = jax.random.randint(k_txt, (B, L), 0, V, dtype=jnp.int32)

    params = {
        "w1": jax.random.normal(k_w1, (D, FEAT), dtype=jnp.float32) * 0.02,
        "b1": jax.random.normal(k_b1, (1, FEAT), dtype=jnp.float32) * 0.02,
        "w2": jax.random.normal(k_w2, (FEAT, OUT), dtype=jnp.float32) * 0.02,
        "b2": jax.random.normal(k_b2, (1, OUT), dtype=jnp.float32) * 0.02,
        "emb": jax.random.normal(k_emb, (V, E), dtype=jnp.float32) * 0.1,
    }

    forward = make_encoder(params)
    image_embed, text_embed = forward(image, text)
    jax.block_until_ready((image_embed, text_embed))

    # Reference (mirrors the kernel's bf16-input / f32-accumulate matmuls).
    x2d = image.reshape(B, D)
    x_bf = x2d.astype(jnp.bfloat16)
    w1_bf = params["w1"].astype(jnp.bfloat16)
    w2_bf = params["w2"].astype(jnp.bfloat16)
    h_ref = jnp.maximum(
        jnp.dot(x_bf, w1_bf, preferred_element_type=jnp.float32) + params["b1"],
        0.0)
    ref_img = jnp.tanh(
        jnp.dot(h_ref.astype(jnp.bfloat16), w2_bf,
                preferred_element_type=jnp.float32) + params["b2"])
    ref_txt = jnp.mean(params["emb"][text], axis=1)   # exact f32 embedding mean

    assert image_embed.shape == (B, OUT) and text_embed.shape == (B, E)
    assert jnp.allclose(image_embed, ref_img, atol=2e-2), \
        float(jnp.max(jnp.abs(image_embed - ref_img)))
    # Text branch is mathematically exact; tolerance covers MXU matmul rounding.
    assert jnp.allclose(text_embed, ref_txt, atol=2e-3), \
        float(jnp.max(jnp.abs(text_embed - ref_txt)))

    print("KERNEL_OK")
</pallas_src>

<mosaic_0001>
module attributes {stable_mosaic.version = 11 : i64} {
  func.func @fused_encoder_kernel(%arg0: i32, %arg1: memref<8x1024xbf16, #tpu.memory_space<vmem>>, %arg2: memref<1024x128xbf16, #tpu.memory_space<vmem>>, %arg3: memref<1x128xf32, #tpu.memory_space<vmem>>, %arg4: memref<128x1024xbf16, #tpu.memory_space<vmem>>, %arg5: memref<1x1024xf32, #tpu.memory_space<vmem>>, %arg6: memref<8x32xf32, #tpu.memory_space<vmem>>, %arg7: memref<32x128xf32, #tpu.memory_space<vmem>>, %arg8: memref<8x1024xf32, #tpu.memory_space<vmem>>, %arg9: memref<8x128xf32, #tpu.memory_space<vmem>>, %arg10: memref<8x128xf32, #tpu.memory_space<vmem>>) attributes {dimension_semantics = [#tpu.dimension_semantics<arbitrary>], iteration_bounds = array<i64: 1>, scalar_prefetch = 0 : i64, scratch_operands = 1 : i64, tpu.core_type = #tpu.core_type<tc>, window_params = [{transform_indices = @transform_0, window_bounds = array<i64: 8, 1024>}, {transform_indices = @transform_1, window_bounds = array<i64: 1024, 128>}, {pipeline_mode = #tpu.pipeline_mode<synchronous>, transform_indices = @transform_2, window_bounds = array<i64: 1, 128>}, {pipeline_mode = #tpu.pipeline_mode<synchronous>, transform_indices = @transform_3, window_bounds = array<i64: 128, 1024>}, {pipeline_mode = #tpu.pipeline_mode<synchronous>, transform_indices = @transform_4, window_bounds = array<i64: 1, 1024>}, {pipeline_mode = #tpu.pipeline_mode<synchronous>, transform_indices = @transform_5, window_bounds = array<i64: 8, 32>}, {pipeline_mode = #tpu.pipeline_mode<synchronous>, transform_indices = @transform_6, window_bounds = array<i64: 32, 128>}, {pipeline_mode = #tpu.pipeline_mode<synchronous>, transform_indices = @transform_7, window_bounds = array<i64: 8, 1024>}, {pipeline_mode = #tpu.pipeline_mode<synchronous>, transform_indices = @transform_8, window_bounds = array<i64: 8, 128>}]} {
    %c0_i32 = arith.constant 0 : i32
    %0 = arith.cmpi eq, %arg0, %c0_i32 : i32
    %1 = arith.extui %0 : i1 to i32
    %c0_i32_0 = arith.constant 0 : i32
    %2 = arith.cmpi ne, %1, %c0_i32_0 : i32
    scf.if %2 {
      %cst_10 = arith.constant 0.000000e+00 : f32
      %12 = vector.broadcast %cst_10 : f32 to vector<8x128xf32>
      %c0_11 = arith.constant 0 : index
      %c0_12 = arith.constant 0 : index
      %13 = vector.load %arg10[%c0_11, %c0_12] : memref<8x128xf32, #tpu.memory_space<vmem>>, vector<8x128xf32>
      tpu.vector_store %arg10[%c0_11, %c0_12], %12 {strides = array<i32>} : memref<8x128xf32, #tpu.memory_space<vmem>>, vector<8x128xf32>,
    } else {
    }
    %c0 = arith.constant 0 : index
    %c0_1 = arith.constant 0 : index
    %3 = vector.load %arg10[%c0, %c0_1] : memref<8x128xf32, #tpu.memory_space<vmem>>, vector<8x128xf32>
    %c0_2 = arith.constant 0 : index
    %c0_3 = arith.constant 0 : index
    %4 = vector.load %arg1[%c0_2, %c0_3] : memref<8x1024xbf16, #tpu.memory_space<vmem>>, vector<8x1024xbf16>
    %c0_4 = arith.constant 0 : index
    %c0_5 = arith.constant 0 : index
    %5 = vector.load %arg2[%c0_4, %c0_5] : memref<1024x128xbf16, #tpu.memory_space<vmem>>, vector<1024x128xbf16>
    %cst = arith.constant dense<0.000000e+00> : vector<8x128xf32>
    %6 = tpu.matmul %4, %5, %cst {dimension_numbers = #tpu.dot_dimension_numbers<[1], [0], [0], [1], [0, 0, 1, 1], [], []>} : vector<8x1024xbf16>, vector<1024x128xbf16>, vector<8x128xf32> -> vector<8x128xf32>
    %7 = arith.addf %3, %6 : vector<8x128xf32>
    %c0_6 = arith.constant 0 : index
    %c0_7 = arith.constant 0 : index
    %8 = vector.load %arg10[%c0_6, %c0_7] : memref<8x128xf32, #tpu.memory_space<vmem>>, vector<8x128xf32>
    tpu.vector_store %arg10[%c0_6, %c0_7], %7 {strides = array<i32>} : memref<8x128xf32, #tpu.memory_space<vmem>>, vector<8x128xf32>,
    %c0_i32_8 = arith.constant 0 : i32
    %9 = arith.cmpi eq, %arg0, %c0_i32_8 : i32
    %10 = arith.extui %9 : i1 to i32
    %c0_i32_9 = arith.constant 0 : i32
    %11 = arith.cmpi ne, %10, %c0_i32_9 : i32
    scf.if %11 {
      %c0_10 = arith.constant 0 : index
      %c0_11 = arith.constant 0 : index
      %12 = vector.load %arg10[%c0_10, %c0_11] : memref<8x128xf32, #tpu.memory_space<vmem>>, vector<8x128xf32>
      %c0_12 = arith.constant 0 : index
      %c0_13 = arith.constant 0 : index
      %13 = vector.load %arg3[%c0_12, %c0_13] : memref<1x128xf32, #tpu.memory_space<vmem>>, vector<1x128xf32>
      %14 = vector.broadcast %13 : vector<1x128xf32> to vector<8x128xf32>
      %15 = arith.addf %12, %14 : vector<8x128xf32>
      %cst_14 = arith.constant 0.000000e+00 : f32
      %16 = vector.broadcast %cst_14 : f32 to vector<8x128xf32>
      %17 = arith.maximumf %15, %16 : vector<8x128xf32>
      %18 = arith.truncf %17 : vector<8x128xf32> to vector<8x128xbf16>
      %c0_15 = arith.constant 0 : index
      %c0_16 = arith.constant 0 : index
      %19 = vector.load %arg4[%c0_15, %c0_16] : memref<128x1024xbf16, #tpu.memory_space<vmem>>, vector<128x1024xbf16>
      %cst_17 = arith.constant dense<0.000000e+00> : vector<8x1024xf32>
      %20 = tpu.matmul %18, %19, %cst_17 {dimension_numbers = #tpu.dot_dimension_numbers<[1], [0], [0], [1], [0, 0, 1, 1], [], []>} : vector<8x128xbf16>, vector<128x1024xbf16>, vector<8x1024xf32> -> vector<8x1024xf32>
      %c0_18 = arith.constant 0 : index
      %c0_19 = arith.constant 0 : index
      %21 = vector.load %arg5[%c0_18, %c0_19] : memref<1x1024xf32, #tpu.memory_space<vmem>>, vector<1x1024xf32>
      %22 = vector.broadcast %21 : vector<1x1024xf32> to vector<8x1024xf32>
      %23 = arith.addf %20, %22 : vector<8x1024xf32>
      %24 = math.tanh %23 : vector<8x1024xf32>
      %c0_20 = arith.constant 0 : index
      %c0_21 = arith.constant 0 : index
      %25 = vector.load %arg8[%c0_20, %c0_21] : memref<8x1024xf32, #tpu.memory_space<vmem>>, vector<8x1024xf32>
      tpu.vector_store %arg8[%c0_20, %c0_21], %24 {strides = array<i32>} : memref<8x1024xf32, #tpu.memory_space<vmem>>, vector<8x1024xf32>,
      %c0_22 = arith.constant 0 : index
      %c0_23 = arith.constant 0 : index
      %26 = vector.load %arg6[%c0_22, %c0_23] : memref<8x32xf32, #tpu.memory_space<vmem>>, vector<8x32xf32>
      %c0_24 = arith.constant 0 : index
      %c0_25 = arith.constant 0 : index
      %27 = vector.load %arg7[%c0_24, %c0_25] : memref<32x128xf32, #tpu.memory_space<vmem>>, vector<32x128xf32>
      %cst_26 = arith.constant dense<0.000000e+00> : vector<8x128xf32>
      %28 = tpu.matmul %26, %27, %cst_26 {dimension_numbers = #tpu.dot_dimension_numbers<[1], [0], [0], [1], [0, 0, 1, 1], [], []>} : vector<8x32xf32>, vector<32x128xf32>, vector<8x128xf32> -> vector<8x128xf32>
      %cst_27 = arith.constant 1.250000e-01 : f32
      %29 = vector.broadcast %cst_27 : f32 to vector<8x128xf32>
      %30 = arith.mulf %28, %29 : vector<8x128xf32>
      %c0_28 = arith.constant 0 : index
      %c0_29 = arith.constant 0 : index
      %31 = vector.load %arg9[%c0_28, %c0_29] : memref<8x128xf32, #tpu.memory_space<vmem>>, vector<8x128xf32>
      tpu.vector_store %arg9[%c0_28, %c0_29], %30 {strides = array<i32>} : memref<8x128xf32, #tpu.memory_space<vmem>>, vector<8x128xf32>,
    } else {
    }
    return
  }
  func.func @transform_0(%arg0: i32) -> (i32, i32) {
    %c0_i32 = arith.constant 0 : i32
    %c0_i32_0 = arith.constant 0 : i32
    return %c0_i32, %arg0 : i32, i32
  }
  func.func @transform_1(%arg0: i32) -> (i32, i32) {
    %c0_i32 = arith.constant 0 : i32
    %c0_i32_0 = arith.constant 0 : i32
    return %arg0, %c0_i32 : i32, i32
  }
  func.func @transform_2(%arg0: i32) -> (i32, i32) {
    %c0_i32 = arith.constant 0 : i32
    %c0_i32_0 = arith.constant 0 : i32
    %c0_i32_1 = arith.constant 0 : i32
    return %c0_i32, %c0_i32_0 : i32, i32
  }
  func.func @transform_3(%arg0: i32) -> (i32, i32) {
    %c0_i32 = arith.constant 0 : i32
    %c0_i32_0 = arith.constant 0 : i32
    %c0_i32_1 = arith.constant 0 : i32
    return %c0_i32, %c0_i32_0 : i32, i32
  }
  func.func @transform_4(%arg0: i32) -> (i32, i32) {
    %c0_i32 = arith.constant 0 : i32
    %c0_i32_0 = arith.constant 0 : i32
    %c0_i32_1 = arith.constant 0 : i32
    return %c0_i32, %c0_i32_0 : i32, i32
  }
  func.func @transform_5(%arg0: i32) -> (i32, i32) {
    %c0_i32 = arith.constant 0 : i32
    %c0_i32_0 = arith.constant 0 : i32
    %c0_i32_1 = arith.constant 0 : i32
    return %c0_i32, %c0_i32_0 : i32, i32
  }
  func.func @transform_6(%arg0: i32) -> (i32, i32) {
    %c0_i32 = arith.constant 0 : i32
    %c0_i32_0 = arith.constant 0 : i32
    %c0_i32_1 = arith.constant 0 : i32
    return %c0_i32, %c0_i32_0 : i32, i32
  }
  func.func @transform_7(%arg0: i32) -> (i32, i32) {
    %c0_i32 = arith.constant 0 : i32
    %c0_i32_0 = arith.constant 0 : i32
    %c0_i32_1 = arith.constant 0 : i32
    return %c0_i32, %c0_i32_0 : i32, i32
  }
  func.func @transform_8(%arg0: i32) -> (i32, i32) {
    %c0_i32 = arith.constant 0 : i32
    %c0_i32_0 = arith.constant 0 : i32
    %c0_i32_1 = arith.constant 0 : i32
    return %c0_i32, %c0_i32_0 : i32, i32
  }
}

</mosaic_0001>

<llo_original>
// kernel: forward.1
$region0: #{forward.1}
  #allocation0 [shape = 'u32[]', space=smem, size = 0x4, offset = 0x4, fixed_abs, tag = 'smem constant byte address 0x4 - core index']
  #allocation1 [shape = 'u32[144,128]{1,0:T(1,128)}', space=vmem, size = 0x12000, scoped, tag = 'internal scratch']
  #allocation2 [shape = 'f32[8,128]{1,0:T(8,128)}', space=vmem, size = 0x1000, scoped, tag = 'scratch operand']
  %s0 = inlined_call_operand.vmem [shape: bf16[8,1024], index: 0, kind: input, shape index: {}]
  %s1 = inlined_call_operand.vmem [shape: bf16[1024,128], index: 1, kind: input, shape index: {}]
  %s2 = inlined_call_operand.vmem [shape: f32[1,128], index: 2, kind: input, shape index: {}]
  %s3 = inlined_call_operand.vmem [shape: bf16[128,1024], index: 3, kind: input, shape index: {}]
  %s4 = inlined_call_operand.vmem [shape: f32[1,1024], index: 4, kind: input, shape index: {}]
  %s5 = inlined_call_operand.vmem [shape: f32[8,32], index: 5, kind: input, shape index: {}]
  %s6 = inlined_call_operand.vmem [shape: f32[32,128], index: 6, kind: input, shape index: {}]
  %s7 = inlined_call_operand.vmem [shape: f32[8,1024], index: 7, kind: output, shape index: {0}]
  %s8 = inlined_call_operand.vmem [shape: f32[8,128], index: 8, kind: output, shape index: {1}]
  %9 = xla_tuple %s7, %s8
  %s10 = sld [smem:[#allocation0]]
  $region54: #{forward.1} parent=0
    _
  %s12 = ssub.s32 1, %s10
  %s13 = scalar_select 0, %s12, %s10
  // Predicated region
  $region2: #{forward.1} parent=0 // pred_check
    _
  $region3: #{forward.1} parent=0 // pred_check_branch
    %15 = sbr.rel (0) target = $region5
  $region4: #{forward.1} parent=0 // pred_region
    _
  $region5: #{forward.1} parent=0 // pred_fallthru
    _
  // Predicated region
  $region6: #{forward.1} parent=0 // pred_check
    _
  $region7: #{forward.1} parent=0 // pred_check_branch
    %17 = sbr.rel (0) target = $region9
  $region8: #{forward.1} parent=0 // pred_region
    _
  $region9: #{forward.1} parent=0 // pred_fallthru
    _
  // Predicated region
  $region10: #{forward.1} parent=0 // pred_check
    _
  $region11: #{forward.1} parent=0 // pred_check_branch
    %19 = sbr.rel (0) target = $region13
  $region12: #{forward.1} parent=0 // pred_region
    _
  $region13: #{forward.1} parent=0 // pred_fallthru
    _
  // Predicated region
  $region14: #{forward.1} parent=0 // pred_check
    _
  $region15: #{forward.1} parent=0 // pred_check_branch
    %21 = sbr.rel (0) target = $region17
  $region16: #{forward.1} parent=0 // pred_region
    _
  $region17: #{forward.1} parent=0 // pred_fallthru
    _
  // Predicated region
  $region18: #{forward.1} parent=0 // pred_check
    _
  $region19: #{forward.1} parent=0 // pred_check_branch
    %23 = sbr.rel (0) target = $region21
  $region20: #{forward.1} parent=0 // pred_region
    _
  $region21: #{forward.1} parent=0 // pred_fallthru
    _
  // Predicated region
  $region22: #{forward.1} parent=0 // pred_check
    _
  $region23: #{forward.1} parent=0 // pred_check_branch
    %25 = sbr.rel (0) target = $region25
  $region24: #{forward.1} parent=0 // pred_region
    _
  $region25: #{forward.1} parent=0 // pred_fallthru
    _
  // Predicated region
  $region26: #{forward.1} parent=0 // pred_check
    _
  $region27: #{forward.1} parent=0 // pred_check_branch
    %27 = sbr.rel (0) target = $region29
  $region28: #{forward.1} parent=0 // pred_region
    _
  $region29: #{forward.1} parent=0 // pred_fallthru
    _
  %p29 = scmp.eq.s32.totalorder 0, 0
  // Predicated region
  $region30: #{forward.1} parent=0 // pred_check
    %p30 = pneg %p29
  $region31: #{forward.1} parent=0 // pred_check_branch
    %32 = sbr.rel (%p30) target = $region33
  $region32: #{forward.1} parent=0 // pred_region
    %33 = vst [vmem:[#allocation2] sm:$0xff] 0.0
  $region33: #{forward.1} parent=0 // pred_fallthru
    _
  %v34 = vld [vmem:[#allocation2] sm:$0xff]
  %v35 = vld [vmem:[%s0] sm:$0xff]
  %v36 = vld [vmem:[%s0 + $0x8] sm:$0xff]
  %v37 = vld [vmem:[%s0 + $0x10] sm:$0xff]
  %v38 = vld [vmem:[%s0 + $0x18] sm:$0xff]
  %v39 = vld [vmem:[%s1] sm:$0xf]
  %v40 = vld [vmem:[%s1 + $0x4] sm:$0xf]
  %v41 = vld [vmem:[%s1 + $0x8] sm:$0xf]
  %v42 = vld [vmem:[%s1 + $0xc] sm:$0xf]
  %v43 = vld [vmem:[%s1 + $0x10] sm:$0xf]
  %v44 = vld [vmem:[%s1 + $0x14] sm:$0xf]
  %v45 = vld [vmem:[%s1 + $0x18] sm:$0xf]
  %v46 = vld [vmem:[%s1 + $0x1c] sm:$0xf]
  %v47 = vld [vmem:[%s1 + $0x20] sm:$0xf]
  %v48 = vld [vmem:[%s1 + $0x24] sm:$0xf]
  %v49 = vld [vmem:[%s1 + $0x28] sm:$0xf]
  %v50 = vld [vmem:[%s1 + $0x2c] sm:$0xf]
  %v51 = vld [vmem:[%s1 + $0x30] sm:$0xf]
  %v52 = vld [vmem:[%s1 + $0x34] sm:$0xf]
  %v53 = vld [vmem:[%s1 + $0x38] sm:$0xf]
  %v54 = vld [vmem:[%s1 + $0x3c] sm:$0xf]
  %v55 = vld [vmem:[%s1 + $0x40] sm:$0xf]
  %v56 = vld [vmem:[%s1 + $0x44] sm:$0xf]
  %v57 = vld [vmem:[%s1 + $0x48] sm:$0xf]
  %v58 = vld [vmem:[%s1 + $0x4c] sm:$0xf]
  %v59 = vld [vmem:[%s1 + $0x50] sm:$0xf]
  %v60 = vld [vmem:[%s1 + $0x54] sm:$0xf]
  %v61 = vld [vmem:[%s1 + $0x58] sm:$0xf]
  %v62 = vld [vmem:[%s1 + $0x5c] sm:$0xf]
  %v63 = vld [vmem:[%s1 + $0x60] sm:$0xf]
  %v64 = vld [vmem:[%s1 + $0x64] sm:$0xf]
  %v65 = vld [vmem:[%s1 + $0x68] sm:$0xf]
  %v66 = vld [vmem:[%s1 + $0x6c] sm:$0xf]
  %v67 = vld [vmem:[%s1 + $0x70] sm:$0xf]
  %v68 = vld [vmem:[%s1 + $0x74] sm:$0xf]
  %v69 = vld [vmem:[%s1 + $0x78] sm:$0xf]
  %v70 = vld [vmem:[%s1 + $0x7c] sm:$0xf]
  %v71 = vld [vmem:[%s1 + $0x80] sm:$0xf]
  %v72 = vld [vmem:[%s1 + $0x84] sm:$0xf]
  %v73 = vld [vmem:[%s1 + $0x88] sm:$0xf]
  %v74 = vld [vmem:[%s1 + $0x8c] sm:$0xf]
  %v75 = vld [vmem:[%s1 + $0x90] sm:$0xf]
  %v76 = vld [vmem:[%s1 + $0x94] sm:$0xf]
  %v77 = vld [vmem:[%s1 + $0x98] sm:$0xf]
  %v78 = vld [vmem:[%s1 + $0x9c] sm:$0xf]
  %v79 = vld [vmem:[%s1 + $0xa0] sm:$0xf]
  %v80 = vld [vmem:[%s1 + $0xa4] sm:$0xf]
  %v81 = vld [vmem:[%s1 + $0xa8] sm:$0xf]
  %v82 = vld [vmem:[%s1 + $0xac] sm:$0xf]
  %v83 = vld [vmem:[%s1 + $0xb0] sm:$0xf]
  %v84 = vld [vmem:[%s1 + $0xb4] sm:$0xf]
  %v85 = vld [vmem:[%s1 + $0xb8] sm:$0xf]
  %v86 = vld [vmem:[%s1 + $0xbc] sm:$0xf]
  %v87 = vld [vmem:[%s1 + $0xc0] sm:$0xf]
  %v88 = vld [vmem:[%s1 + $0xc4] sm:$0xf]
  %v89 = vld [vmem:[%s1 + $0xc8] sm:$0xf]
  %v90 = vld [vmem:[%s1 + $0xcc] sm:$0xf]
  %v91 = vld [vmem:[%s1 + $0xd0] sm:$0xf]
  %v92 = vld [vmem:[%s1 + $0xd4] sm:$0xf]
  %v93 = vld [vmem:[%s1 + $0xd8] sm:$0xf]
  %v94 = vld [vmem:[%s1 + $0xdc] sm:$0xf]
  %v95 = vld [vmem:[%s1 + $0xe0] sm:$0xf]
  %v96 = vld [vmem:[%s1 + $0xe4] sm:$0xf]
  %v97 = vld [vmem:[%s1 + $0xe8] sm:$0xf]
  %v98 = vld [vmem:[%s1 + $0xec] sm:$0xf]
  %v99 = vld [vmem:[%s1 + $0xf0] sm:$0xf]
  %v100 = vld [vmem:[%s1 + $0xf4] sm:$0xf]
  %v101 = vld [vmem:[%s1 + $0xf8] sm:$0xf]
  %v102 = vld [vmem:[%s1 + $0xfc] sm:$0xf]
  %v103 = vld [vmem:[%s1 + $0x100] sm:$0xf]
  %v104 = vld [vmem:[%s1 + $0x104] sm:$0xf]
  %v105 = vld [vmem:[%s1 + $0x108] sm:$0xf]
  %v106 = vld [vmem:[%s1 + $0x10c] sm:$0xf]
  %v107 = vld [vmem:[%s1 + $0x110] sm:$0xf]
  %v108 = vld [vmem:[%s1 + $0x114] sm:$0xf]
  %v109 = vld [vmem:[%s1 + $0x118] sm:$0xf]
  %v110 = vld [vmem:[%s1 + $0x11c] sm:$0xf]
  %v111 = vld [vmem:[%s1 + $0x120] sm:$0xf]
  %v112 = vld [vmem:[%s1 + $0x124] sm:$0xf]
  %v113 = vld [vmem:[%s1 + $0x128] sm:$0xf]
  %v114 = vld [vmem:[%s1 + $0x12c] sm:$0xf]
  %v115 = vld [vmem:[%s1 + $0x130] sm:$0xf]
  %v116 = vld [vmem:[%s1 + $0x134] sm:$0xf]
  %v117 = vld [vmem:[%s1 + $0x138] sm:$0xf]
  %v118 = vld [vmem:[%s1 + $0x13c] sm:$0xf]
  %v119 = vld [vmem:[%s1 + $0x140] sm:$0xf]
  %v120 = vld [vmem:[%s1 + $0x144] sm:$0xf]
  %v121 = vld [vmem:[%s1 + $0x148] sm:$0xf]
  %v122 = vld [vmem:[%s1 + $0x14c] sm:$0xf]
  %v123 = vld [vmem:[%s1 + $0x150] sm:$0xf]
  %v124 = vld [vmem:[%s1 + $0x154] sm:$0xf]
  %v125 = vld [vmem:[%s1 + $0x158] sm:$0xf]
  %v126 = vld [vmem:[%s1 + $0x15c] sm:$0xf]
  %v127 = vld [vmem:[%s1 + $0x160] sm:$0xf]
  %v128 = vld [vmem:[%s1 + $0x164] sm:$0xf]
  %v129 = vld [vmem:[%s1 + $0x168] sm:$0xf]
  %v130 = vld [vmem:[%s1 + $0x16c] sm:$0xf]
  %v131 = vld [vmem:[%s1 + $0x170] sm:$0xf]
  %v132 = vld [vmem:[%s1 + $0x174] sm:$0xf]
  %v133 = vld [vmem:[%s1 + $0x178] sm:$0xf]
  %v134 = vld [vmem:[%s1 + $0x17c] sm:$0xf]
  %v135 = vld [vmem:[%s1 + $0x180] sm:$0xf]
  %v136 = vld [vmem:[%s1 + $0x184] sm:$0xf]
  %v137 = vld [vmem:[%s1 + $0x188] sm:$0xf]
  %v138 = vld [vmem:[%s1 + $0x18c] sm:$0xf]
  %v139 = vld [vmem:[%s1 + $0x190] sm:$0xf]
  %v140 = vld [vmem:[%s1 + $0x194] sm:$0xf]
  %v141 = vld [vmem:[%s1 + $0x198] sm:$0xf]
  %v142 = vld [vmem:[%s1 + $0x19c] sm:$0xf]
  %v143 = vld [vmem:[%s1 + $0x1a0] sm:$0xf]
  %v144 = vld [vmem:[%s1 + $0x1a4] sm:$0xf]
  %v145 = vld [vmem:[%s1 + $0x1a8] sm:$0xf]
  %v146 = vld [vmem:[%s1 + $0x1ac] sm:$0xf]
  %v147 = vld [vmem:[%s1 + $0x1b0] sm:$0xf]
  %v148 = vld [vmem:[%s1 + $0x1b4] sm:$0xf]
  %v149 = vld [vmem:[%s1 + $0x1b8] sm:$0xf]
  %v150 = vld [vmem:[%s1 + $0x1bc] sm:$0xf]
  %v151 = vld [vmem:[%s1 + $0x1c0] sm:$0xf]
  %v152 = vld [vmem:[%s1 + $0x1c4] sm:$0xf]
  %v153 = vld [vmem:[%s1 + $0x1c8] sm:$0xf]
  %v154 = vld [vmem:[%s1 + $0x1cc] sm:$0xf]
  %v155 = vld [vmem:[%s1 + $0x1d0] sm:$0xf]
  %v156 = vld [vmem:[%s1 + $0x1d4] sm:$0xf]
  %v157 = vld [vmem:[%s1 + $0x1d8] sm:$0xf]
  %v158 = vld [vmem:[%s1 + $0x1dc] sm:$0xf]
  %v159 = vld [vmem:[%s1 + $0x1e0] sm:$0xf]
  %v160 = vld [vmem:[%s1 + $0x1e4] sm:$0xf]
  %v161 = vld [vmem:[%s1 + $0x1e8] sm:$0xf]
  %v162 = vld [vmem:[%s1 + $0x1ec] sm:$0xf]
  %v163 = vld [vmem:[%s1 + $0x1f0] sm:$0xf]
  %v164 = vld [vmem:[%s1 + $0x1f4] sm:$0xf]
  %v165 = vld [vmem:[%s1 + $0x1f8] sm:$0xf]
  %v166 = vld [vmem:[%s1 + $0x1fc] sm:$0xf]
  %v171 = vunpack.c.l.b16 %v35
  %v172 = vunpack.c.h.b16 %v35
  %v173 = vunpack.c.l.b16 %v36
  %v174 = vunpack.c.h.b16 %v36
  %v175 = vunpack.c.l.b16 %v37
  %v176 = vunpack.c.h.b16 %v37
  %v177 = vunpack.c.l.b16 %v38
  %v178 = vunpack.c.h.b16 %v38
  %v179 = vpack.c.b16 %v171, %v171
  %v180 = vpack.c.b16 %v172, %v172
  %v181 = vpack.c.b16 %v173, %v173
  %v182 = vpack.c.b16 %v174, %v174
  %v183 = vpack.c.b16 %v175, %v175
  %v184 = vpack.c.b16 %v176, %v176
  %v185 = vpack.c.b16 %v177, %v177
  %v186 = vpack.c.b16 %v178, %v178
  %v323 = vunpack.c.l.b16 %v39
  %v324 = vunpack.c.l.b16 %v40
  %v325 = vunpack.c.l.b16 %v41
  %v326 = vunpack.c.l.b16 %v42
  %v327 = vunpack.c.l.b16 %v43
  %v328 = vunpack.c.l.b16 %v44
  %v329 = vunpack.c.l.b16 %v45
  %v330 = vunpack.c.l.b16 %v46
  %v331 = vunpack.c.l.b16 %v47
  %v332 = vunpack.c.l.b16 %v48
  %v333 = vunpack.c.l.b16 %v49
  %v334 = vunpack.c.l.b16 %v50
  %v335 = vunpack.c.l.b16 %v51
  %v336 = vunpack.c.l.b16 %v52
  %v337 = vunpack.c.l.b16 %v53
  %v338 = vunpack.c.l.b16 %v54
  %v339 = vunpack.c.l.b16 %v55
  %v340 = vunpack.c.l.b16 %v56
  %v341 = vunpack.c.l.b16 %v57
  %v342 = vunpack.c.l.b16 %v58
  %v343 = vunpack.c.l.b16 %v59
  %v344 = vunpack.c.l.b16 %v60
  %v345 = vunpack.c.l.b16 %v61
  %v346 = vunpack.c.l.b16 %v62
  %v347 = vunpack.c.l.b16 %v63
  %v348 = vunpack.c.l.b16 %v64
  %v349 = vunpack.c.l.b16 %v65
  %v350 = vunpack.c.l.b16 %v66
  %v351 = vunpack.c.l.b16 %v67
  %v352 = vunpack.c.l.b16 %v68
  %v353 = vunpack.c.l.b16 %v69
  %v354 = vunpack.c.l.b16 %v70
  %v355 = vunpack.c.l.b16 %v71
  %v356 = vunpack.c.l.b16 %v72
  %v357 = vunpack.c.l.b16 %v73
  %v358 = vunpack.c.l.b16 %v74
  %v359 = vunpack.c.l.b16 %v75
  %v360 = vunpack.c.l.b16 %v76
  %v361 = vunpack.c.l.b16 %v77
  %v362 = vunpack.c.l.b16 %v78
  %v363 = vunpack.c.l.b16 %v79
  %v364 = vunpack.c.l.b16 %v80
  %v365 = vunpack.c.l.b16 %v81
  %v366 = vunpack.c.l.b16 %v82
  %v367 = vunpack.c.l.b16 %v83
  %v368 = vunpack.c.l.b16 %v84
  %v369 = vunpack.c.l.b16 %v85
  %v370 = vunpack.c.l.b16 %v86
  %v371 = vunpack.c.l.b16 %v87
  %v372 = vunpack.c.l.b16 %v88
  %v373 = vunpack.c.l.b16 %v89
  %v374 = vunpack.c.l.b16 %v90
  %v375 = vunpack.c.l.b16 %v91
  %v376 = vunpack.c.l.b16 %v92
  %v377 = vunpack.c.l.b16 %v93
  %v378 = vunpack.c.l.b16 %v94
  %v379 = vunpack.c.l.b16 %v95
  %v380 = vunpack.c.l.b16 %v96
  %v381 = vunpack.c.l.b16 %v97
  %v382 = vunpack.c.l.b16 %v98
  %v383 = vunpack.c.l.b16 %v99
  %v384 = vunpack.c.l.b16 %v100
  %v385 = vunpack.c.l.b16 %v101
  %v386 = vunpack.c.l.b16 %v102
  %v387 = vunpack.c.l.b16 %v103
  %v388 = vunpack.c.l.b16 %v104
  %v389 = vunpack.c.l.b16 %v105
  %v390 = vunpack.c.l.b16 %v106
  %v391 = vunpack.c.l.b16 %v107
  %v392 = vunpack.c.l.b16 %v108
  %v393 = vunpack.c.l.b16 %v109
  %v394 = vunpack.c.l.b16 %v110
  %v395 = vunpack.c.l.b16 %v111
  %v396 = vunpack.c.l.b16 %v112
  %v397 = vunpack.c.l.b16 %v113
  %v398 = vunpack.c.l.b16 %v114
  %v399 = vunpack.c.l.b16 %v115
  %v400 = vunpack.c.l.b16 %v116
  %v401 = vunpack.c.l.b16 %v117
  %v402 = vunpack.c.l.b16 %v118
  %v403 = vunpack.c.l.b16 %v119
  %v404 = vunpack.c.l.b16 %v120
  %v405 = vunpack.c.l.b16 %v121
  %v406 = vunpack.c.l.b16 %v122
  %v407 = vunpack.c.l.b16 %v123
  %v408 = vunpack.c.l.b16 %v124
  %v409 = vunpack.c.l.b16 %v125
  %v410 = vunpack.c.l.b16 %v126
  %v411 = vunpack.c.l.b16 %v127
  %v412 = vunpack.c.l.b16 %v128
  %v413 = vunpack.c.l.b16 %v129
  %v414 = vunpack.c.l.b16 %v130
  %v415 = vunpack.c.l.b16 %v131
  %v416 = vunpack.c.l.b16 %v132
  %v417 = vunpack.c.l.b16 %v133
  %v418 = vunpack.c.l.b16 %v134
  %v419 = vunpack.c.l.b16 %v135
  %v420 = vunpack.c.l.b16 %v136
  %v421 = vunpack.c.l.b16 %v137
  %v422 = vunpack.c.l.b16 %v138
  %v423 = vunpack.c.l.b16 %v139
  %v424 = vunpack.c.l.b16 %v140
  %v425 = vunpack.c.l.b16 %v141
  %v426 = vunpack.c.l.b16 %v142
  %v427 = vunpack.c.l.b16 %v143
  %v428 = vunpack.c.l.b16 %v144
  %v429 = vunpack.c.l.b16 %v145
  %v430 = vunpack.c.l.b16 %v146
  %v431 = vunpack.c.l.b16 %v147
  %v432 = vunpack.c.l.b16 %v148
  %v433 = vunpack.c.l.b16 %v149
  %v434 = vunpack.c.l.b16 %v150
  %v435 = vunpack.c.l.b16 %v151
  %v436 = vunpack.c.l.b16 %v152
  %v437 = vunpack.c.l.b16 %v153
  %v438 = vunpack.c.l.b16 %v154
  %v439 = vunpack.c.l.b16 %v155
  %v440 = vunpack.c.l.b16 %v156
  %v441 = vunpack.c.l.b16 %v157
  %v442 = vunpack.c.l.b16 %v158
  %v443 = vunpack.c.l.b16 %v159
  %v444 = vunpack.c.l.b16 %v160
  %v445 = vunpack.c.l.b16 %v161
  %v446 = vunpack.c.l.b16 %v162
  %v447 = vunpack.c.l.b16 %v163
  %v448 = vunpack.c.l.b16 %v164
  %v449 = vunpack.c.l.b16 %v165
  %v450 = vunpack.c.l.b16 %v166
  %v451 = vpack.c.b16 %v324, %v323
  %v452 = vpack.c.b16 %v326, %v325
  %v453 = vpack.c.b16 %v328, %v327
  %v454 = vpack.c.b16 %v330, %v329
  %v455 = vpack.c.b16 %v332, %v331
  %v456 = vpack.c.b16 %v334, %v333
  %v457 = vpack.c.b16 %v336, %v335
  %v458 = vpack.c.b16 %v338, %v337
  %v459 = vpack.c.b16 %v340, %v339
  %v460 = vpack.c.b16 %v342, %v341
  %v461 = vpack.c.b16 %v344, %v343
  %v462 = vpack.c.b16 %v346, %v345
  %v463 = vpack.c.b16 %v348, %v347
  %v464 = vpack.c.b16 %v350, %v349
  %v465 = vpack.c.b16 %v352, %v351
  %v466 = vpack.c.b16 %v354, %v353
  %v467 = vpack.c.b16 %v356, %v355
  %v468 = vpack.c.b16 %v358, %v357
  %v469 = vpack.c.b16 %v360, %v359
  %v470 = vpack.c.b16 %v362, %v361
  %v471 = vpack.c.b16 %v364, %v363
  %v472 = vpack.c.b16 %v366, %v365
  %v473 = vpack.c.b16 %v368, %v367
  %v474 = vpack.c.b16 %v370, %v369
  %v475 = vpack.c.b16 %v372, %v371
  %v476 = vpack.c.b16 %v374, %v373
  %v477 = vpack.c.b16 %v376, %v375
  %v478 = vpack.c.b16 %v378, %v377
  %v479 = vpack.c.b16 %v380, %v379
  %v480 = vpack.c.b16 %v382, %v381
  %v481 = vpack.c.b16 %v384, %v383
  %v482 = vpack.c.b16 %v386, %v385
  %v483 = vpack.c.b16 %v388, %v387
  %v484 = vpack.c.b16 %v390, %v389
  %v485 = vpack.c.b16 %v392, %v391
  %v486 = vpack.c.b16 %v394, %v393
  %v487 = vpack.c.b16 %v396, %v395
  %v488 = vpack.c.b16 %v398, %v397
  %v489 = vpack.c.b16 %v400, %v399
  %v490 = vpack.c.b16 %v402, %v401
  %v491 = vpack.c.b16 %v404, %v403
  %v492 = vpack.c.b16 %v406, %v405
  %v493 = vpack.c.b16 %v408, %v407
  %v494 = vpack.c.b16 %v410, %v409
  %v495 = vpack.c.b16 %v412, %v411
  %v496 = vpack.c.b16 %v414, %v413
  %v497 = vpack.c.b16 %v416, %v415
  %v498 = vpack.c.b16 %v418, %v417
  %v499 = vpack.c.b16 %v420, %v419
  %v500 = vpack.c.b16 %v422, %v421
  %v501 = vpack.c.b16 %v424, %v423
  %v502 = vpack.c.b16 %v426, %v425
  %v503 = vpack.c.b16 %v428, %v427
  %v504 = vpack.c.b16 %v430, %v429
  %v505 = vpack.c.b16 %v432, %v431
  %v506 = vpack.c.b16 %v434, %v433
  %v507 = vpack.c.b16 %v436, %v435
  %v508 = vpack.c.b16 %v438, %v437
  %v509 = vpack.c.b16 %v440, %v439
  %v510 = vpack.c.b16 %v442, %v441
  %v511 = vpack.c.b16 %v444, %v443
  %v512 = vpack.c.b16 %v446, %v445
  %v513 = vpack.c.b16 %v448, %v447
  %v514 = vpack.c.b16 %v450, %v449
  %579 = vmatprep.subr.bf16.mxu0 0
  %580 = vmatpush1.bf16.msra.mxu0 %v451
  %581 = vmatprep.subr.bf16.mxu0 0
  %582 = vmatpush1.bf16.msra.mxu0 %v452
  %583 = vmatprep.subr.bf16.mxu0 0
  %584 = vmatpush1.bf16.msra.mxu0 %v453
  %585 = vmatprep.subr.bf16.mxu0 0
  %586 = vmatpush1.bf16.msra.mxu0 %v454
  %587 = vmatprep.subr.bf16.mxu0 0
  %588 = vmatpush1.bf16.msra.mxu0 %v455
  %589 = vmatprep.subr.bf16.mxu0 0
  %590 = vmatpush1.bf16.msra.mxu0 %v456
  %591 = vmatprep.subr.bf16.mxu0 0
  %592 = vmatpush1.bf16.msra.mxu0 %v457
  %593 = vmatprep.subr.bf16.mxu0 0
  %594 = vmatpush1.bf16.msra.mxu0 %v458
  %595 = vmatprep.subr.bf16.mxu0 0
  %596 = vmatpush1.bf16.msra.mxu0 %v459
  %597 = vmatprep.subr.bf16.mxu0 0
  %598 = vmatpush1.bf16.msra.mxu0 %v460
  %599 = vmatprep.subr.bf16.mxu0 0
  %600 = vmatpush1.bf16.msra.mxu0 %v461
  %601 = vmatprep.subr.bf16.mxu0 0
  %602 = vmatpush1.bf16.msra.mxu0 %v462
  %603 = vmatprep.subr.bf16.mxu0 0
  %604 = vmatpush1.bf16.msra.mxu0 %v463
  %605 = vmatprep.subr.bf16.mxu0 0
  %606 = vmatpush1.bf16.msra.mxu0 %v464
  %607 = vmatprep.subr.bf16.mxu0 0
  %608 = vmatpush1.bf16.msra.mxu0 %v465
  %609 = vmatprep.subr.bf16.mxu0 0
  %610 = vmatpush1.bf16.msra.mxu0 %v466
  %611 = vmatprep.mubr.bf16.mxu0 %v180
  %612 = vmatmul.mubr.bf16.gmra.mrb[0].mxu0 %v179
  %v613 = vpop.f32.mrb[0].mxu0
  %v614 = vadd.f32 0.0, %v613
  %v615 = vpop.f32.mrb[0].mxu0
  %v616 = vpop.f32.mrb[0].mxu0
  %v617 = vpop.f32.mrb[0].mxu0
  %618 = vdwg.mxu0
  %619 = vmatprep.subr.bf16.mxu0 0
  %620 = vmatpush1.bf16.msra.mxu0 %v467
  %621 = vmatprep.subr.bf16.mxu0 0
  %622 = vmatpush1.bf16.msra.mxu0 %v468
  %623 = vmatprep.subr.bf16.mxu0 0
  %624 = vmatpush1.bf16.msra.mxu0 %v469
  %625 = vmatprep.subr.bf16.mxu0 0
  %626 = vmatpush1.bf16.msra.mxu0 %v470
  %627 = vmatprep.subr.bf16.mxu0 0
  %628 = vmatpush1.bf16.msra.mxu0 %v471
  %629 = vmatprep.subr.bf16.mxu0 0
  %630 = vmatpush1.bf16.msra.mxu0 %v472
  %631 = vmatprep.subr.bf16.mxu0 0
  %632 = vmatpush1.bf16.msra.mxu0 %v473
  %633 = vmatprep.subr.bf16.mxu0 0
  %634 = vmatpush1.bf16.msra.mxu0 %v474
  %635 = vmatprep.subr.bf16.mxu0 0
  %636 = vmatpush1.bf16.msra.mxu0 %v475
  %637 = vmatprep.subr.bf16.mxu0 0
  %638 = vmatpush1.bf16.msra.mxu0 %v476
  %639 = vmatprep.subr.bf16.mxu0 0
  %640 = vmatpush1.bf16.msra.mxu0 %v477
  %641 = vmatprep.subr.bf16.mxu0 0
  %642 = vmatpush1.bf16.msra.mxu0 %v478
  %643 = vmatprep.subr.bf16.mxu0 0
  %644 = vmatpush1.bf16.msra.mxu0 %v479
  %645 = vmatprep.subr.bf16.mxu0 0
  %646 = vmatpush1.bf16.msra.mxu0 %v480
  %647 = vmatprep.subr.bf16.mxu0 0
  %648 = vmatpush1.bf16.msra.mxu0 %v481
  %649 = vmatprep.subr.bf16.mxu0 0
  %650 = vmatpush1.bf16.msra.mxu0 %v482
  %651 = vmatprep.mubr.bf16.mxu0 %v182
  %652 = vmatmul.mubr.bf16.gmra.mrb[0].mxu0 %v181
  %v653 = vpop.f32.mrb[0].mxu0
  %v654 = vadd.f32 %v614, %v653
  %v655 = vpop.f32.mrb[0].mxu0
  %v656 = vpop.f32.mrb[0].mxu0
  %v657 = vpop.f32.mrb[0].mxu0
  %658 = vdwg.mxu0
  %659 = vmatprep.subr.bf16.mxu0 0
  %660 = vmatpush1.bf16.msra.mxu0 %v483
  %661 = vmatprep.subr.bf16.mxu0 0
  %662 = vmatpush1.bf16.msra.mxu0 %v484
  %663 = vmatprep.subr.bf16.mxu0 0
  %664 = vmatpush1.bf16.msra.mxu0 %v485
  %665 = vmatprep.subr.bf16.mxu0 0
  %666 = vmatpush1.bf16.msra.mxu0 %v486
  %667 = vmatprep.subr.bf16.mxu0 0
  %668 = vmatpush1.bf16.msra.mxu0 %v487
  %669 = vmatprep.subr.bf16.mxu0 0
  %670 = vmatpush1.bf16.msra.mxu0 %v488
  %671 = vmatprep.subr.bf16.mxu0 0
  %672 = vmatpush1.bf16.msra.mxu0 %v489
  %673 = vmatprep.subr.bf16.mxu0 0
  %674 = vmatpush1.bf16.msra.mxu0 %v490
  %675 = vmatprep.subr.bf16.mxu0 0
  %676 = vmatpush1.bf16.msra.mxu0 %v491
  %677 = vmatprep.subr.bf16.mxu0 0
  %678 = vmatpush1.bf16.msra.mxu0 %v492
  %679 = vmatprep.subr.bf16.mxu0 0
  %680 = vmatpush1.bf16.msra.mxu0 %v493
  %681 = vmatprep.subr.bf16.mxu0 0
  %682 = vmatpush1.bf16.msra.mxu0 %v494
  %683 = vmatprep.subr.bf16.mxu0 0
  %684 = vmatpush1.bf16.msra.mxu0 %v495
  %685 = vmatprep.subr.bf16.mxu0 0
  %686 = vmatpush1.bf16.msra.mxu0 %v496
  %687 = vmatprep.subr.bf16.mxu0 0
  %688 = vmatpush1.bf16.msra.mxu0 %v497
  %689 = vmatprep.subr.bf16.mxu0 0
  %690 = vmatpush1.bf16.msra.mxu0 %v498
  %691 = vmatprep.mubr.bf16.mxu0 %v184
  %692 = vmatmul.mubr.bf16.gmra.mrb[0].mxu0 %v183
  %v693 = vpop.f32.mrb[0].mxu0
  %v694 = vadd.f32 %v654, %v693
  %v695 = vpop.f32.mrb[0].mxu0
  %v696 = vpop.f32.mrb[0].mxu0
  %v697 = vpop.f32.mrb[0].mxu0
  %698 = vdwg.mxu0
  %699 = vmatprep.subr.bf16.mxu0 0
  %700 = vmatpush1.bf16.msra.mxu0 %v499
  %701 = vmatprep.subr.bf16.mxu0 0
  %702 = vmatpush1.bf16.msra.mxu0 %v500
  %703 = vmatprep.subr.bf16.mxu0 0
  %704 = vmatpush1.bf16.msra.mxu0 %v501
  %705 = vmatprep.subr.bf16.mxu0 0
  %706 = vmatpush1.bf16.msra.mxu0 %v502
  %707 = vmatprep.subr.bf16.mxu0 0
  %708 = vmatpush1.bf16.msra.mxu0 %v503
  %709 = vmatprep.subr.bf16.mxu0 0
  %710 = vmatpush1.bf16.msra.mxu0 %v504
  %711 = vmatprep.subr.bf16.mxu0 0
  %712 = vmatpush1.bf16.msra.mxu0 %v505
  %713 = vmatprep.subr.bf16.mxu0 0
  %714 = vmatpush1.bf16.msra.mxu0 %v506
  %715 = vmatprep.subr.bf16.mxu0 0
  %716 = vmatpush1.bf16.msra.mxu0 %v507
  %717 = vmatprep.subr.bf16.mxu0 0
  %718 = vmatpush1.bf16.msra.mxu0 %v508
  %719 = vmatprep.subr.bf16.mxu0 0
  %720 = vmatpush1.bf16.msra.mxu0 %v509
  %721 = vmatprep.subr.bf16.mxu0 0
  %722 = vmatpush1.bf16.msra.mxu0 %v510
  %723 = vmatprep.subr.bf16.mxu0 0
  %724 = vmatpush1.bf16.msra.mxu0 %v511
  %725 = vmatprep.subr.bf16.mxu0 0
  %726 = vmatpush1.bf16.msra.mxu0 %v512
  %727 = vmatprep.subr.bf16.mxu0 0
  %728 = vmatpush1.bf16.msra.mxu0 %v513
  %729 = vmatprep.subr.bf16.mxu0 0
  %730 = vmatpush1.bf16.msra.mxu0 %v514
  %731 = vmatprep.mubr.bf16.mxu0 %v186
  %732 = vmatmul.mubr.bf16.gmra.mrb[0].mxu0 %v185
  %v733 = vpop.f32.mrb[0].mxu0
  %v734 = vadd.f32 %v694, %v733
  %v735 = vpop.f32.mrb[0].mxu0
  %v736 = vpop.f32.mrb[0].mxu0
  %v737 = vpop.f32.mrb[0].mxu0
  %738 = vdwg.mxu0
  %v739 = vadd.f32 %v34, %v734
  %740 = vst [vmem:[#allocation2] sm:$0xff] %v739
  // Predicated region
  $region34: #{forward.1} parent=0 // pred_check
    %p741 = pneg %p29
  $region35: #{forward.1} parent=0 // pred_check_branch
    %743 = sbr.rel (%p741) target = $region37
  $region36: #{forward.1} parent=0 // pred_region
    %v744 = vld [vmem:[#allocation2] sm:$0xff]
    %v745 = vld [vmem:[%s2] sm:$0x1]
    %v747 = vlaneseq
    %v748 = vshrl.u32 %v747, 7
    %v749 = vsub.s32 0, %v748
    %v750 = vrot.slane %v745, %v749
    %v752 = vadd.f32 %v744, %v750
    %v753 = vmax.f32 %v752, 0.0
    %v754 = vpack.c.bf16 %v753, %v753
    %v755 = vld [vmem:[%s3] sm:$0xff]
    %v756 = vld [vmem:[%s3 + $0x8] sm:$0xff]
    %v757 = vld [vmem:[%s3 + $0x10] sm:$0xff]
    %v758 = vld [vmem:[%s3 + $0x18] sm:$0xff]
    %v759 = vld [vmem:[%s3 + $0x20] sm:$0xff]
    %v760 = vld [vmem:[%s3 + $0x28] sm:$0xff]
    %v761 = vld [vmem:[%s3 + $0x30] sm:$0xff]
    %v762 = vld [vmem:[%s3 + $0x38] sm:$0xff]
    %v763 = vld [vmem:[%s3 + $0x40] sm:$0xff]
    %v764 = vld [vmem:[%s3 + $0x48] sm:$0xff]
    %v765 = vld [vmem:[%s3 + $0x50] sm:$0xff]
    %v766 = vld [vmem:[%s3 + $0x58] sm:$0xff]
    %v767 = vld [vmem:[%s3 + $0x60] sm:$0xff]
    %v768 = vld [vmem:[%s3 + $0x68] sm:$0xff]
    %v769 = vld [vmem:[%s3 + $0x70] sm:$0xff]
    %v770 = vld [vmem:[%s3 + $0x78] sm:$0xff]
    %v771 = vld [vmem:[%s3 + $0x80] sm:$0xff]
    %v772 = vld [vmem:[%s3 + $0x88] sm:$0xff]
    %v773 = vld [vmem:[%s3 + $0x90] sm:$0xff]
    %v774 = vld [vmem:[%s3 + $0x98] sm:$0xff]
    %v775 = vld [vmem:[%s3 + $0xa0] sm:$0xff]
    %v776 = vld [vmem:[%s3 + $0xa8] sm:$0xff]
    %v777 = vld [vmem:[%s3 + $0xb0] sm:$0xff]
    %v778 = vld [vmem:[%s3 + $0xb8] sm:$0xff]
    %v779 = vld [vmem:[%s3 + $0xc0] sm:$0xff]
    %v780 = vld [vmem:[%s3 + $0xc8] sm:$0xff]
    %v781 = vld [vmem:[%s3 + $0xd0] sm:$0xff]
    %v782 = vld [vmem:[%s3 + $0xd8] sm:$0xff]
    %v783 = vld [vmem:[%s3 + $0xe0] sm:$0xff]
    %v784 = vld [vmem:[%s3 + $0xe8] sm:$0xff]
    %v785 = vld [vmem:[%s3 + $0xf0] sm:$0xff]
    %v786 = vld [vmem:[%s3 + $0xf8] sm:$0xff]
    %v787 = vld [vmem:[%s3 + $0x100] sm:$0xff]
    %v788 = vld [vmem:[%s3 + $0x108] sm:$0xff]
    %v789 = vld [vmem:[%s3 + $0x110] sm:$0xff]
    %v790 = vld [vmem:[%s3 + $0x118] sm:$0xff]
    %v791 = vld [vmem:[%s3 + $0x120] sm:$0xff]
    %v792 = vld [vmem:[%s3 + $0x128] sm:$0xff]
    %v793 = vld [vmem:[%s3 + $0x130] sm:$0xff]
    %v794 = vld [vmem:[%s3 + $0x138] sm:$0xff]
    %v795 = vld [vmem:[%s3 + $0x140] sm:$0xff]
    %v796 = vld [vmem:[%s3 + $0x148] sm:$0xff]
    %v797 = vld [vmem:[%s3 + $0x150] sm:$0xff]
    %v798 = vld [vmem:[%s3 + $0x158] sm:$0xff]
    %v799 = vld [vmem:[%s3 + $0x160] sm:$0xff]
    %v800 = vld [vmem:[%s3 + $0x168] sm:$0xff]
    %v801 = vld [vmem:[%s3 + $0x170] sm:$0xff]
    %v802 = vld [vmem:[%s3 + $0x178] sm:$0xff]
    %v803 = vld [vmem:[%s3 + $0x180] sm:$0xff]
    %v804 = vld [vmem:[%s3 + $0x188] sm:$0xff]
    %v805 = vld [vmem:[%s3 + $0x190] sm:$0xff]
    %v806 = vld [vmem:[%s3 + $0x198] sm:$0xff]
    %v807 = vld [vmem:[%s3 + $0x1a0] sm:$0xff]
    %v808 = vld [vmem:[%s3 + $0x1a8] sm:$0xff]
    %v809 = vld [vmem:[%s3 + $0x1b0] sm:$0xff]
    %v810 = vld [vmem:[%s3 + $0x1b8] sm:$0xff]
    %v811 = vld [vmem:[%s3 + $0x1c0] sm:$0xff]
    %v812 = vld [vmem:[%s3 + $0x1c8] sm:$0xff]
    %v813 = vld [vmem:[%s3 + $0x1d0] sm:$0xff]
    %v814 = vld [vmem:[%s3 + $0x1d8] sm:$0xff]
    %v815 = vld [vmem:[%s3 + $0x1e0] sm:$0xff]
    %v816 = vld [vmem:[%s3 + $0x1e8] sm:$0xff]
    %v817 = vld [vmem:[%s3 + $0x1f0] sm:$0xff]
    %v818 = vld [vmem:[%s3 + $0x1f8] sm:$0xff]
    %v819 = vld [vmem:[%s4] sm:$0xff]
    %v821 = vlaneseq
    %v822 = vshrl.u32 %v821, 7
    %v823 = vsub.s32 0, %v822
    %v824 = vrot.slane %v819, %v823
    %v825 = vlaneseq
    %v826 = vshrl.u32 %v825, 7
    %v827 = vsub.s32 1, %v826
    %v828 = vrot.slane %v819, %v827
    %v829 = vlaneseq
    %v830 = vshrl.u32 %v829, 7
    %v831 = vsub.s32 2, %v830
    %v832 = vrot.slane %v819, %v831
    %v833 = vlaneseq
    %v834 = vshrl.u32 %v833, 7
    %v835 = vsub.s32 3, %v834
    %v836 = vrot.slane %v819, %v835
    %v837 = vlaneseq
    %v838 = vshrl.u32 %v837, 7
    %v839 = vsub.s32 4, %v838
    %v840 = vrot.slane %v819, %v839
    %v841 = vlaneseq
    %v842 = vshrl.u32 %v841, 7
    %v843 = vsub.s32 5, %v842
    %v844 = vrot.slane %v819, %v843
    %v845 = vlaneseq
    %v846 = vshrl.u32 %v845, 7
    %v847 = vsub.s32 6, %v846
    %v848 = vrot.slane %v819, %v847
    %v849 = vlaneseq
    %v850 = vshrl.u32 %v849, 7
    %v851 = vsub.s32 7, %v850
    %v852 = vrot.slane %v819, %v851
    %v925 = vunpack.c.l.b16 %v755
    %v926 = vunpack.c.h.b16 %v755
    %v927 = vunpack.c.l.b16 %v756
    %v928 = vunpack.c.h.b16 %v756
    %v929 = vunpack.c.l.b16 %v757
    %v930 = vunpack.c.h.b16 %v757
    %v931 = vunpack.c.l.b16 %v758
    %v932 = vunpack.c.h.b16 %v758
    %v933 = vunpack.c.l.b16 %v759
    %v934 = vunpack.c.h.b16 %v759
    %v935 = vunpack.c.l.b16 %v760
    %v936 = vunpack.c.h.b16 %v760
    %v937 = vunpack.c.l.b16 %v761
    %v938 = vunpack.c.h.b16 %v761
    %v939 = vunpack.c.l.b16 %v762
    %v940 = vunpack.c.h.b16 %v762
    %v941 = vunpack.c.l.b16 %v763
    %v942 = vunpack.c.h.b16 %v763
    %v943 = vunpack.c.l.b16 %v764
    %v944 = vunpack.c.h.b16 %v764
    %v945 = vunpack.c.l.b16 %v765
    %v946 = vunpack.c.h.b16 %v765
    %v947 = vunpack.c.l.b16 %v766
    %v948 = vunpack.c.h.b16 %v766
    %v949 = vunpack.c.l.b16 %v767
    %v950 = vunpack.c.h.b16 %v767
    %v951 = vunpack.c.l.b16 %v768
    %v952 = vunpack.c.h.b16 %v768
    %v953 = vunpack.c.l.b16 %v769
    %v954 = vunpack.c.h.b16 %v769
    %v955 = vunpack.c.l.b16 %v770
    %v956 = vunpack.c.h.b16 %v770
    %v957 = vunpack.c.l.b16 %v771
    %v958 = vunpack.c.h.b16 %v771
    %v959 = vunpack.c.l.b16 %v772
    %v960 = vunpack.c.h.b16 %v772
    %v961 = vunpack.c.l.b16 %v773
    %v962 = vunpack.c.h.b16 %v773
    %v963 = vunpack.c.l.b16 %v774
    %v964 = vunpack.c.h.b16 %v774
    %v965 = vunpack.c.l.b16 %v775
    %v966 = vunpack.c.h.b16 %v775
    %v967 = vunpack.c.l.b16 %v776
    %v968 = vunpack.c.h.b16 %v776
    %v969 = vunpack.c.l.b16 %v777
    %v970 = vunpack.c.h.b16 %v777
    %v971 = vunpack.c.l.b16 %v778
    %v972 = vunpack.c.h.b16 %v778
    %v973 = vunpack.c.l.b16 %v779
    %v974 = vunpack.c.h.b16 %v779
    %v975 = vunpack.c.l.b16 %v780
    %v976 = vunpack.c.h.b16 %v780
    %v977 = vunpack.c.l.b16 %v781
    %v978 = vunpack.c.h.b16 %v781
    %v979 = vunpack.c.l.b16 %v782
    %v980 = vunpack.c.h.b16 %v782
    %v981 = vunpack.c.l.b16 %v783
    %v982 = vunpack.c.h.b16 %v783
    %v983 = vunpack.c.l.b16 %v784
    %v984 = vunpack.c.h.b16 %v784
    %v985 = vunpack.c.l.b16 %v785
    %v986 = vunpack.c.h.b16 %v785
    %v987 = vunpack.c.l.b16 %v786
    %v988 = vunpack.c.h.b16 %v786
    %v989 = vunpack.c.l.b16 %v787
    %v990 = vunpack.c.h.b16 %v787
    %v991 = vunpack.c.l.b16 %v788
    %v992 = vunpack.c.h.b16 %v788
    %v993 = vunpack.c.l.b16 %v789
    %v994 = vunpack.c.h.b16 %v789
    %v995 = vunpack.c.l.b16 %v790
    %v996 = vunpack.c.h.b16 %v790
    %v997 = vunpack.c.l.b16 %v791
    %v998 = vunpack.c.h.b16 %v791
    %v999 = vunpack.c.l.b16 %v792
    %v1000 = vunpack.c.h.b16 %v792
    %v1001 = vunpack.c.l.b16 %v793
    %v1002 = vunpack.c.h.b16 %v793
    %v1003 = vunpack.c.l.b16 %v794
    %v1004 = vunpack.c.h.b16 %v794
    %v1005 = vunpack.c.l.b16 %v795
    %v1006 = vunpack.c.h.b16 %v795
    %v1007 = vunpack.c.l.b16 %v796
    %v1008 = vunpack.c.h.b16 %v796
    %v1009 = vunpack.c.l.b16 %v797
    %v1010 = vunpack.c.h.b16 %v797
    %v1011 = vunpack.c.l.b16 %v798
    %v1012 = vunpack.c.h.b16 %v798
    %v1013 = vunpack.c.l.b16 %v799
    %v1014 = vunpack.c.h.b16 %v799
    %v1015 = vunpack.c.l.b16 %v800
    %v1016 = vunpack.c.h.b16 %v800
    %v1017 = vunpack.c.l.b16 %v801
    %v1018 = vunpack.c.h.b16 %v801
    %v1019 = vunpack.c.l.b16 %v802
    %v1020 = vunpack.c.h.b16 %v802
    %v1021 = vunpack.c.l.b16 %v803
    %v1022 = vunpack.c.h.b16 %v803
    %v1023 = vunpack.c.l.b16 %v804
    %v1024 = vunpack.c.h.b16 %v804
    %v1025 = vunpack.c.l.b16 %v805
    %v1026 = vunpack.c.h.b16 %v805
    %v1027 = vunpack.c.l.b16 %v806
    %v1028 = vunpack.c.h.b16 %v806
    %v1029 = vunpack.c.l.b16 %v807
    %v1030 = vunpack.c.h.b16 %v807
    %v1031 = vunpack.c.l.b16 %v808
    %v1032 = vunpack.c.h.b16 %v808
    %v1033 = vunpack.c.l.b16 %v809
    %v1034 = vunpack.c.h.b16 %v809
    %v1035 = vunpack.c.l.b16 %v810
    %v1036 = vunpack.c.h.b16 %v810
    %v1037 = vunpack.c.l.b16 %v811
    %v1038 = vunpack.c.h.b16 %v811
    %v1039 = vunpack.c.l.b16 %v812
    %v1040 = vunpack.c.h.b16 %v812
    %v1041 = vunpack.c.l.b16 %v813
    %v1042 = vunpack.c.h.b16 %v813
    %v1043 = vunpack.c.l.b16 %v814
    %v1044 = vunpack.c.h.b16 %v814
    %v1045 = vunpack.c.l.b16 %v815
    %v1046 = vunpack.c.h.b16 %v815
    %v1047 = vunpack.c.l.b16 %v816
    %v1048 = vunpack.c.h.b16 %v816
    %v1049 = vunpack.c.l.b16 %v817
    %v1050 = vunpack.c.h.b16 %v817
    %v1051 = vunpack.c.l.b16 %v818
    %v1052 = vunpack.c.h.b16 %v818
    %v1053 = vpack.c.b16 %v933, %v925
    %v1054 = vpack.c.b16 %v934, %v926
    %v1055 = vpack.c.b16 %v935, %v927
    %v1056 = vpack.c.b16 %v936, %v928
    %v1057 = vpack.c.b16 %v937, %v929
    %v1058 = vpack.c.b16 %v938, %v930
    %v1059 = vpack.c.b16 %v939, %v931
    %v1060 = vpack.c.b16 %v940, %v932
    %v1061 = vpack.c.b16 %v949, %v941
    %v1062 = vpack.c.b16 %v950, %v942
    %v1063 = vpack.c.b16 %v951, %v943
    %v1064 = vpack.c.b16 %v952, %v944
    %v1065 = vpack.c.b16 %v953, %v945
    %v1066 = vpack.c.b16 %v954, %v946
    %v1067 = vpack.c.b16 %v955, %v947
    %v1068 = vpack.c.b16 %v956, %v948
    %v1069 = vpack.c.b16 %v965, %v957
    %v1070 = vpack.c.b16 %v966, %v958
    %v1071 = vpack.c.b16 %v967, %v959
    %v1072 = vpack.c.b16 %v968, %v960
    %v1073 = vpack.c.b16 %v969, %v961
    %v1074 = vpack.c.b16 %v970, %v962
    %v1075 = vpack.c.b16 %v971, %v963
    %v1076 = vpack.c.b16 %v972, %v964
    %v1077 = vpack.c.b16 %v981, %v973
    %v1078 = vpack.c.b16 %v982, %v974
    %v1079 = vpack.c.b16 %v983, %v975
    %v1080 = vpack.c.b16 %v984, %v976
    %v1081 = vpack.c.b16 %v985, %v977
    %v1082 = vpack.c.b16 %v986, %v978
    %v1083 = vpack.c.b16 %v987, %v979
    %v1084 = vpack.c.b16 %v988, %v980
    %v1085 = vpack.c.b16 %v997, %v989
    %v1086 = vpack.c.b16 %v998, %v990
    %v1087 = vpack.c.b16 %v999, %v991
    %v1088 = vpack.c.b16 %v1000, %v992
    %v1089 = vpack.c.b16 %v1001, %v993
    %v1090 = vpack.c.b16 %v1002, %v994
    %v1091 = vpack.c.b16 %v1003, %v995
    %v1092 = vpack.c.b16 %v1004, %v996
    %v1093 = vpack.c.b16 %v1013, %v1005
    %v1094 = vpack.c.b16 %v1014, %v1006
    %v1095 = vpack.c.b16 %v1015, %v1007
    %v1096 = vpack.c.b16 %v1016, %v1008
    %v1097 = vpack.c.b16 %v1017, %v1009
    %v1098 = vpack.c.b16 %v1018, %v1010
    %v1099 = vpack.c.b16 %v1019, %v1011
    %v1100 = vpack.c.b16 %v1020, %v1012
    %v1101 = vpack.c.b16 %v1029, %v1021
    %v1102 = vpack.c.b16 %v1030, %v1022
    %v1103 = vpack.c.b16 %v1031, %v1023
    %v1104 = vpack.c.b16 %v1032, %v1024
    %v1105 = vpack.c.b16 %v1033, %v1025
    %v1106 = vpack.c.b16 %v1034, %v1026
    %v1107 = vpack.c.b16 %v1035, %v1027
    %v1108 = vpack.c.b16 %v1036, %v1028
    %v1109 = vpack.c.b16 %v1045, %v1037
    %v1110 = vpack.c.b16 %v1046, %v1038
    %v1111 = vpack.c.b16 %v1047, %v1039
    %v1112 = vpack.c.b16 %v1048, %v1040
    %v1113 = vpack.c.b16 %v1049, %v1041
    %v1114 = vpack.c.b16 %v1050, %v1042
    %v1115 = vpack.c.b16 %v1051, %v1043
    %v1116 = vpack.c.b16 %v1052, %v1044
    %1181 = vmatprep.subr.bf16.mxu0 %v1054
    %1182 = vmatpush1.bf16.msra.mxu0 %v1053
    %1183 = vmatprep.subr.bf16.mxu0 %v1062
    %1184 = vmatpush1.bf16.msra.mxu0 %v1061
    %1185 = vmatprep.subr.bf16.mxu0 %v1070
    %1186 = vmatpush1.bf16.msra.mxu0 %v1069
    %1187 = vmatprep.subr.bf16.mxu0 %v1078
    %1188 = vmatpush1.bf16.msra.mxu0 %v1077
    %1189 = vmatprep.subr.bf16.mxu0 %v1086
    %1190 = vmatpush1.bf16.msra.mxu0 %v1085
    %1191 = vmatprep.subr.bf16.mxu0 %v1094
    %1192 = vmatpush1.bf16.msra.mxu0 %v1093
    %1193 = vmatprep.subr.bf16.mxu0 %v1102
    %1194 = vmatpush1.bf16.msra.mxu0 %v1101
    %1195 = vmatprep.subr.bf16.mxu0 %v1110
    %1196 = vmatpush1.bf16.msra.mxu0 %v1109
    %1197 = vmatprep.subr.bf16.mxu0 0
    %1198 = vmatpush1.bf16.msra.mxu0 0
    %1199 = vmatprep.subr.bf16.mxu0 0
    %1200 = vmatpush1.bf16.msra.mxu0 0
    %1201 = vmatprep.subr.bf16.mxu0 0
    %1202 = vmatpush1.bf16.msra.mxu0 0
    %1203 = vmatprep.subr.bf16.mxu0 0
    %1204 = vmatpush1.bf16.msra.mxu0 0
    %1205 = vmatprep.subr.bf16.mxu0 0
    %1206 = vmatpush1.bf16.msra.mxu0 0
    %1207 = vmatprep.subr.bf16.mxu0 0
    %1208 = vmatpush1.bf16.msra.mxu0 0
    %1209 = vmatprep.subr.bf16.mxu0 0
    %1210 = vmatpush1.bf16.msra.mxu0 0
    %1211 = vmatprep.subr.bf16.mxu0 0
    %1212 = vmatpush1.bf16.msra.mxu0 0
    %1213 = vmatprep.mubr.bf16.mxu0 0
    %1214 = vmatmul.mubr.bf16.gmra.mrb[0].mxu0 %v754
    %v1215 = vpop.f32.mrb[0].mxu0
    %v1216 = vadd.f32 %v824, %v1215
    %v1217 = vpop.f32.mrb[0].mxu0
    %v1218 = vadd.f32 %v828, %v1217
    %v1219 = vpop.f32.mrb[0].mxu0
    %v1220 = vpop.f32.mrb[0].mxu0
    %1221 = vdwg.mxu0
    %1222 = vmatprep.subr.bf16.mxu0 %v1056
    %1223 = vmatpush1.bf16.msra.mxu0 %v1055
    %1224 = vmatprep.subr.bf16.mxu0 %v1064
    %1225 = vmatpush1.bf16.msra.mxu0 %v1063
    %1226 = vmatprep.subr.bf16.mxu0 %v1072
    %1227 = vmatpush1.bf16.msra.mxu0 %v1071
    %1228 = vmatprep.subr.bf16.mxu0 %v1080
    %1229 = vmatpush1.bf16.msra.mxu0 %v1079
    %1230 = vmatprep.subr.bf16.mxu0 %v1088
    %1231 = vmatpush1.bf16.msra.mxu0 %v1087
    %1232 = vmatprep.subr.bf16.mxu0 %v1096
    %1233 = vmatpush1.bf16.msra.mxu0 %v1095
    %1234 = vmatprep.subr.bf16.mxu0 %v1104
    %1235 = vmatpush1.bf16.msra.mxu0 %v1103
    %1236 = vmatprep.subr.bf16.mxu0 %v1112
    %1237 = vmatpush1.bf16.msra.mxu0 %v1111
    %1238 = vmatprep.subr.bf16.mxu0 0
    %1239 = vmatpush1.bf16.msra.mxu0 0
    %1240 = vmatprep.subr.bf16.mxu0 0
    %1241 = vmatpush1.bf16.msra.mxu0 0
    %1242 = vmatprep.subr.bf16.mxu0 0
    %1243 = vmatpush1.bf16.msra.mxu0 0
    %1244 = vmatprep.subr.bf16.mxu0 0
    %1245 = vmatpush1.bf16.msra.mxu0 0
    %1246 = vmatprep.subr.bf16.mxu0 0
    %1247 = vmatpush1.bf16.msra.mxu0 0
    %1248 = vmatprep.subr.bf16.mxu0 0
    %1249 = vmatpush1.bf16.msra.mxu0 0
    %1250 = vmatprep.subr.bf16.mxu0 0
    %1251 = vmatpush1.bf16.msra.mxu0 0
    %1252 = vmatprep.subr.bf16.mxu0 0
    %1253 = vmatpush1.bf16.msra.mxu0 0
    %1254 = vmatprep.mubr.bf16.mxu0 0
    %1255 = vmatmul.mubr.bf16.gmra.mrb[0].mxu0 %v754
    %v1256 = vpop.f32.mrb[0].mxu0
    %v1257 = vadd.f32 %v832, %v1256
    %v1258 = vpop.f32.mrb[0].mxu0
    %v1259 = vadd.f32 %v836, %v1258
    %v1260 = vpop.f32.mrb[0].mxu0
    %v1261 = vpop.f32.mrb[0].mxu0
    %1262 = vdwg.mxu0
    %1263 = vmatprep.subr.bf16.mxu0 %v1058
    %1264 = vmatpush1.bf16.msra.mxu0 %v1057
    %1265 = vmatprep.subr.bf16.mxu0 %v1066
    %1266 = vmatpush1.bf16.msra.mxu0 %v1065
    %1267 = vmatprep.subr.bf16.mxu0 %v1074
    %1268 = vmatpush1.bf16.msra.mxu0 %v1073
    %1269 = vmatprep.subr.bf16.mxu0 %v1082
    %1270 = vmatpush1.bf16.msra.mxu0 %v1081
    %1271 = vmatprep.subr.bf16.mxu0 %v1090
    %1272 = vmatpush1.bf16.msra.mxu0 %v1089
    %1273 = vmatprep.subr.bf16.mxu0 %v1098
    %1274 = vmatpush1.bf16.msra.mxu0 %v1097
    %1275 = vmatprep.subr.bf16.mxu0 %v1106
    %1276 = vmatpush1.bf16.msra.mxu0 %v1105
    %1277 = vmatprep.subr.bf16.mxu0 %v1114
    %1278 = vmatpush1.bf16.msra.mxu0 %v1113
    %1279 = vmatprep.subr.bf16.mxu0 0
    %1280 = vmatpush1.bf16.msra.mxu0 0
    %1281 = vmatprep.subr.bf16.mxu0 0
    %1282 = vmatpush1.bf16.msra.mxu0 0
    %1283 = vmatprep.subr.bf16.mxu0 0
    %1284 = vmatpush1.bf16.msra.mxu0 0
    %1285 = vmatprep.subr.bf16.mxu0 0
    %1286 = vmatpush1.bf16.msra.mxu0 0
    %1287 = vmatprep.subr.bf16.mxu0 0
    %1288 = vmatpush1.bf16.msra.mxu0 0
    %1289 = vmatprep.subr.bf16.mxu0 0
    %1290 = vmatpush1.bf16.msra.mxu0 0
    %1291 = vmatprep.subr.bf16.mxu0 0
    %1292 = vmatpush1.bf16.msra.mxu0 0
    %1293 = vmatprep.subr.bf16.mxu0 0
    %1294 = vmatpush1.bf16.msra.mxu0 0
    %1295 = vmatprep.mubr.bf16.mxu0 0
    %1296 = vmatmul.mubr.bf16.gmra.mrb[0].mxu0 %v754
    %v1297 = vpop.f32.mrb[0].mxu0
    %v1298 = vadd.f32 %v840, %v1297
    %v1299 = vpop.f32.mrb[0].mxu0
    %v1300 = vadd.f32 %v844, %v1299
    %v1301 = vpop.f32.mrb[0].mxu0
    %v1302 = vpop.f32.mrb[0].mxu0
    %1303 = vdwg.mxu0
    %1304 = vmatprep.subr.bf16.mxu0 %v1060
    %1305 = vmatpush1.bf16.msra.mxu0 %v1059
    %1306 = vmatprep.subr.bf16.mxu0 %v1068
    %1307 = vmatpush1.bf16.msra.mxu0 %v1067
    %1308 = vmatprep.subr.bf16.mxu0 %v1076
    %1309 = vmatpush1.bf16.msra.mxu0 %v1075
    %1310 = vmatprep.subr.bf16.mxu0 %v1084
    %1311 = vmatpush1.bf16.msra.mxu0 %v1083
    %1312 = vmatprep.subr.bf16.mxu0 %v1092
    %1313 = vmatpush1.bf16.msra.mxu0 %v1091
    %1314 = vmatprep.subr.bf16.mxu0 %v1100
    %1315 = vmatpush1.bf16.msra.mxu0 %v1099
    %1316 = vmatprep.subr.bf16.mxu0 %v1108
    %1317 = vmatpush1.bf16.msra.mxu0 %v1107
    %1318 = vmatprep.subr.bf16.mxu0 %v1116
    %1319 = vmatpush1.bf16.msra.mxu0 %v1115
    %1320 = vmatprep.subr.bf16.mxu0 0
    %1321 = vmatpush1.bf16.msra.mxu0 0
    %1322 = vmatprep.subr.bf16.mxu0 0
    %1323 = vmatpush1.bf16.msra.mxu0 0
    %1324 = vmatprep.subr.bf16.mxu0 0
    %1325 = vmatpush1.bf16.msra.mxu0 0
    %1326 = vmatprep.subr.bf16.mxu0 0
    %1327 = vmatpush1.bf16.msra.mxu0 0
    %1328 = vmatprep.subr.bf16.mxu0 0
    %1329 = vmatpush1.bf16.msra.mxu0 0
    %1330 = vmatprep.subr.bf16.mxu0 0
    %1331 = vmatpush1.bf16.msra.mxu0 0
    %1332 = vmatprep.subr.bf16.mxu0 0
    %1333 = vmatpush1.bf16.msra.mxu0 0
    %1334 = vmatprep.subr.bf16.mxu0 0
    %1335 = vmatpush1.bf16.msra.mxu0 0
    %1336 = vmatprep.mubr.bf16.mxu0 0
    %1337 = vmatmul.mubr.bf16.gmra.mrb[0].mxu0 %v754
    %v1338 = vpop.f32.mrb[0].mxu0
    %v1339 = vadd.f32 %v848, %v1338
    %v1340 = vpop.f32.mrb[0].mxu0
    %v1341 = vadd.f32 %v852, %v1340
    %v1342 = vpop.f32.mrb[0].mxu0
    %v1343 = vpop.f32.mrb[0].mxu0
    %1344 = vdwg.mxu0
    %v1345 = vtanh.pop %v1216
    %v1346 = vtanh.pop %v1218
    %v1347 = vtanh.pop %v1257
    %v1348 = vtanh.pop %v1259
    %v1349 = vtanh.pop %v1298
    %v1350 = vtanh.pop %v1300
    %v1351 = vtanh.pop %v1339
    %v1352 = vtanh.pop %v1341
    %1353 = vst [vmem:[%s7] sm:$0xff] %v1345
    %1354 = vst [vmem:[%s7 + $0x8] sm:$0xff] %v1346
    %1355 = vst [vmem:[%s7 + $0x10] sm:$0xff] %v1347
    %1356 = vst [vmem:[%s7 + $0x18] sm:$0xff] %v1348
    %1357 = vst [vmem:[%s7 + $0x20] sm:$0xff] %v1349
    %1358 = vst [vmem:[%s7 + $0x28] sm:$0xff] %v1350
    %1359 = vst [vmem:[%s7 + $0x30] sm:$0xff] %v1351
    %1360 = vst [vmem:[%s7 + $0x38] sm:$0xff] %v1352
    %v1361 = vld [vmem:[%s5] sm:$0xff]
    %v1362 = vld [vmem:[%s6] sm:$0xff]
    %v1363 = vld [vmem:[%s6 + $0x8] sm:$0xff]
    %v1364 = vld [vmem:[%s6 + $0x10] sm:$0xff]
    %v1365 = vld [vmem:[%s6 + $0x18] sm:$0xff]
    %vm1366 = vcmask 261120
    %v1368 = vsel %vm1366, %v1361, 0
    %1370 = vmatprep.subr.mxu0 0.0
    %1371 = vmatpush1.msra.mxu0 %v1362
    %1372 = vmatprep.subr.mxu0 0.0
    %1373 = vmatpush1.msra.mxu0 %v1363
    %1374 = vmatprep.subr.mxu0 0.0
    %1375 = vmatpush1.msra.mxu0 %v1364
    %1376 = vmatprep.subr.mxu0 0.0
    %1377 = vmatpush1.msra.mxu0 %v1365
    %1378 = vmatprep.subr.mxu0 0.0
    %1379 = vmatpush1.msra.mxu0 0.0
    %1380 = vmatprep.subr.mxu0 0.0
    %1381 = vmatpush1.msra.mxu0 0.0
    %1382 = vmatprep.subr.mxu0 0.0
    %1383 = vmatpush1.msra.mxu0 0.0
    %1384 = vmatprep.subr.mxu0 0.0
    %1385 = vmatpush1.msra.mxu0 0.0
    %1386 = vmatprep.subr.mxu0 0.0
    %1387 = vmatpush1.msra.mxu0 0.0
    %1388 = vmatprep.subr.mxu0 0.0
    %1389 = vmatpush1.msra.mxu0 0.0
    %1390 = vmatprep.subr.mxu0 0.0
    %1391 = vmatpush1.msra.mxu0 0.0
    %1392 = vmatprep.subr.mxu0 0.0
    %1393 = vmatpush1.msra.mxu0 0.0
    %1394 = vmatprep.subr.mxu0 0.0
    %1395 = vmatpush1.msra.mxu0 0.0
    %1396 = vmatprep.subr.mxu0 0.0
    %1397 = vmatpush1.msra.mxu0 0.0
    %1398 = vmatprep.subr.mxu0 0.0
    %1399 = vmatpush1.msra.mxu0 0.0
    %1400 = vmatprep.subr.mxu0 0.0
    %1401 = vmatpush1.msra.mxu0 0.0
    %1402 = vmatprep.subr.mxu0 0.0
    %1403 = vmatpush1.msra.mxu0 0.0
    %1404 = vmatprep.subr.mxu0 0.0
    %1405 = vmatpush1.msra.mxu0 0.0
    %1406 = vmatprep.subr.mxu0 0.0
    %1407 = vmatpush1.msra.mxu0 0.0
    %1408 = vmatprep.subr.mxu0 0.0
    %1409 = vmatpush1.msra.mxu0 0.0
    %1410 = vmatprep.subr.mxu0 0.0
    %1411 = vmatpush1.msra.mxu0 0.0
    %1412 = vmatprep.subr.mxu0 0.0
    %1413 = vmatpush1.msra.mxu0 0.0
    %1414 = vmatprep.subr.mxu0 0.0
    %1415 = vmatpush1.msra.mxu0 0.0
    %1416 = vmatprep.subr.mxu0 0.0
    %1417 = vmatpush1.msra.mxu0 0.0
    %1418 = vmatprep.subr.mxu0 0.0
    %1419 = vmatpush1.msra.mxu0 0.0
    %1420 = vmatprep.subr.mxu0 0.0
    %1421 = vmatpush1.msra.mxu0 0.0
    %1422 = vmatprep.subr.mxu0 0.0
    %1423 = vmatpush1.msra.mxu0 0.0
    %1424 = vmatprep.subr.mxu0 0.0
    %1425 = vmatpush1.msra.mxu0 0.0
    %1426 = vmatprep.subr.mxu0 0.0
    %1427 = vmatpush1.msra.mxu0 0.0
    %1428 = vmatprep.subr.mxu0 0.0
    %1429 = vmatpush1.msra.mxu0 0.0
    %1430 = vmatprep.subr.mxu0 0.0
    %1431 = vmatpush1.msra.mxu0 0.0
    %1432 = vmatprep.subr.mxu0 0.0
    %1433 = vmatpush1.msra.mxu0 0.0
    %1434 = vmatprep.mubr.f32.mxu0 0.0
    %1435 = vmatmul.mubr.f32.gmra.mrb[0].mxu0 %v1368
    %v1436 = vpop.f32.mrb[0].mxu0
    %v1437 = vadd.f32 0.0, %v1436
    %v1438 = vpop.f32.mrb[0].mxu0
    %1439 = vdwg.mxu0
    %v1440 = vmul.f32 %v1437, 0.125
    %1441 = vst [vmem:[%s8] sm:$0xff] %v1440
  $region37: #{forward.1} parent=0 // pred_fallthru
    _
  // Predicated region
  $region38: #{forward.1} parent=0 // pred_check
    _
  $region39: #{forward.1} parent=0 // pred_check_branch
    %1443 = sbr.rel (0) target = $region41
  $region40: #{forward.1} parent=0 // pred_region
    _
  $region41: #{forward.1} parent=0 // pred_fallthru
    _
  // Predicated region
  $region42: #{forward.1} parent=0 // pred_check
    _
  $region43: #{forward.1} parent=0 // pred_check_branch
    %1445 = sbr.rel (0) target = $region45
  $region44: #{forward.1} parent=0 // pred_region
    _
  $region45: #{forward.1} parent=0 // pred_fallthru
    _
  // Predicated region
  $region46: #{forward.1} parent=0 // pred_check
    _
  $region47: #{forward.1} parent=0 // pred_check_branch
    %1447 = sbr.rel (0) target = $region49
  $region48: #{forward.1} parent=0 // pred_region
    _
  $region49: #{forward.1} parent=0 // pred_fallthru
    _
  // Predicated region
  $region50: #{forward.1} parent=0 // pred_check
    _
  $region51: #{forward.1} parent=0 // pred_check_branch
    %1449 = sbr.rel (0) target = $region53
  $region52: #{forward.1} parent=0 // pred_region
    _
  $region53: #{forward.1} parent=0 // pred_fallthru
    _

</llo_original>
